<compile_context>
chip_gen: v6e
topology: v6e:2x2x1
jax: 0.10.0
libtpu: 0.0.40
codegen_flags: <defaults>
</compile_context>

<pallas_src>
from functools import partial

import numpy as np
import jax
import jax.numpy as jnp
from jax.experimental import pallas as pl
from jax.experimental.pallas import tpu as pltpu


def _round_up(x: int, m: int) -> int:
    return ((x + m - 1) // m) * m


# -----------------------------------------------------------------------------
# Fused kernel: all heads packed along the lane dim; one MXU pass per layer.
# -----------------------------------------------------------------------------
def _fused_heads_kernel(n_layers,
                        x_ref, w_in_ref, b_in_ref,
                        w_hid_ref, b_hid_ref, gamma_ref, beta_ref,
                        gavg_ref, w_out_ref, b_out_ref,
                        out_ref):
    # Hoisted loads (JAX does not CSE broadcast_in_dim -> emit once, not per layer)
    b_in = b_in_ref[...]        # (1, Hp)
    gamma = gamma_ref[...]      # (1, Hp)   zeros in the pad block
    beta = beta_ref[...]        # (1, Hp)
    gavg = gavg_ref[...]        # (Hp, Hp)  1/H inside each head's HxH diagonal block
    b_hid = b_hid_ref[...]      # (L, 1, Hp)

    # Input linear, all heads at once: (TM, latent) @ (latent, Hp)
    h = jnp.dot(x_ref[...], w_in_ref[...],
                preferred_element_type=jnp.float32) + b_in

    # n_layers x [Linear(block-diag) -> LeakyReLU(0.2) -> per-head LayerNorm]
    for l in range(n_layers):   # static unroll, small trip count
        h = jnp.dot(h, w_hid_ref[l],
                    preferred_element_type=jnp.float32) + b_hid[l]
        h = jnp.where(h > 0, h, 0.2 * h)                      # F.leaky_relu(x, 0.2)
        # Per-head LayerNorm via group-averaging matmul: keeps the reduction on
        # the MXU, no cross-lane reshapes. Pad block stays identically zero.
        mean = jnp.dot(h, gavg, preferred_element_type=jnp.float32)
        hc = h - mean
        var = jnp.dot(hc * hc, gavg, preferred_element_type=jnp.float32)
        h = hc * jax.lax.rsqrt(var + 1e-5)                    # LayerNorm eps=1e-5
        h = h * gamma + beta

    # Output linear: all heads -> one lane-dense (TM, OUTp) slab
    out_ref[...] = (jnp.dot(h, w_out_ref[...],
                            preferred_element_type=jnp.float32) + b_out_ref[...])


def run_fused(x2d, packed, n_layers, tm):
    """x2d: (M, latent) f32 -> (M, OUT_pad) f32 packed output slab."""
    M, latent = x2d.shape
    Hp = packed["w_in"].shape[1]
    OUTp = packed["w_out"].shape[1]

    M_pad = _round_up(max(M, 8), tm)
    if M_pad != M:
        x2d = jnp.pad(x2d, ((0, M_pad - M), (0, 0)))

    in_specs = [
        pl.BlockSpec((tm, latent), lambda i: (i, 0)),                    # x (streamed)
        pl.BlockSpec(packed["w_in"].shape, lambda i: (0, 0)),            # weights stay resident
        pl.BlockSpec(packed["b_in"].shape, lambda i: (0, 0)),
        pl.BlockSpec(packed["w_hid"].shape, lambda i: (0, 0, 0)),
        pl.BlockSpec(packed["b_hid"].shape, lambda i: (0, 0, 0)),
        pl.BlockSpec(packed["gamma"].shape, lambda i: (0, 0)),
        pl.BlockSpec(packed["beta"].shape, lambda i: (0, 0)),
        pl.BlockSpec(packed["gavg"].shape, lambda i: (0, 0)),
        pl.BlockSpec(packed["w_out"].shape, lambda i: (0, 0)),
        pl.BlockSpec(packed["b_out"].shape, lambda i: (0, 0)),
    ]
    out_spec = pl.BlockSpec((tm, OUTp), lambda i: (i, 0))

    f = pl.pallas_call(
        partial(_fused_heads_kernel, n_layers),
        out_shape=jax.ShapeDtypeStruct((M_pad, OUTp), jnp.float32),
        grid=(M_pad // tm,),
        in_specs=in_specs,
        out_specs=out_spec,
        compiler_params=pltpu.CompilerParams(
            dimension_semantics=("parallel",)),
    )
    y = f(x2d, packed["w_in"], packed["b_in"],
          packed["w_hid"], packed["b_hid"],
          packed["gamma"], packed["beta"], packed["gavg"],
          packed["w_out"], packed["b_out"])
    return y[:M]


# -----------------------------------------------------------------------------
# Parameter init (deterministic, PyTorch-Linear-style uniform +-1/sqrt(fan_in))
# -----------------------------------------------------------------------------
def _linear_init(key, fan_in, fan_out):
    kw, kb = jax.random.split(key)
    bound = 1.0 / np.sqrt(fan_in)
    w = jax.random.uniform(kw, (fan_in, fan_out), jnp.float32, -bound, bound)
    b = jax.random.uniform(kb, (1, fan_out), jnp.float32, -bound, bound)
    return w, b


def init_head_params(key, latent_dim, hidden, out_dim, n_layers):
    keys = jax.random.split(key, n_layers + 2)
    w_in, b_in = _linear_init(keys[0], latent_dim, hidden)
    w_hid, b_hid = [], []
    for l in range(n_layers):
        w, b = _linear_init(keys[1 + l], hidden, hidden)
        w_hid.append(w)
        b_hid.append(b)
    w_out, b_out = _linear_init(keys[-1], hidden, out_dim)
    return {
        "w_in": w_in, "b_in": b_in,
        "w_hid": jnp.stack(w_hid, axis=0),            # (n_layers, H, H)
        "b_hid": jnp.stack(b_hid, axis=0),            # (n_layers, 1, H)
        "gamma": jnp.ones((1, hidden), jnp.float32),  # shared LayerNorm per head
        "beta": jnp.zeros((1, hidden), jnp.float32),
        "w_out": w_out, "b_out": b_out,
    }


# -----------------------------------------------------------------------------
# MultiHeadTransform wrapper
# -----------------------------------------------------------------------------
class MultiHeadTransformPallas:
    def __init__(self, latent_dim, hidden_channels, shapes, n_layers, key):
        self.latent_dim = latent_dim
        self.hidden_channels = hidden_channels
        self.shapes = shapes
        self.n_layers = n_layers

        # per-head parameters (kept for the pure-JAX reference)
        self.head_params = {}
        keys = jax.random.split(key, len(shapes))
        for k, name in zip(keys, shapes):
            out_dim = int(np.prod(shapes[name]))
            self.head_params[name] = init_head_params(
                k, latent_dim, hidden_channels, out_dim, n_layers)

        self._pack()

    def _pack(self):
        """Pack all heads along the lane dimension (block-diag hidden weights)."""
        H = self.hidden_channels
        names = list(self.shapes.keys())
        nh = len(names)
        Hp = _round_up(nh * H, 128)                      # lane-dense hidden width
        out_dims = [int(np.prod(self.shapes[n])) for n in names]
        offs = np.cumsum([0] + out_dims)
        OUTp = _round_up(int(offs[-1]), 128)             # lane-dense output slab
        self.out_offsets = {n: (int(offs[i]), out_dims[i])
                            for i, n in enumerate(names)}

        L = self.n_layers
        w_in = np.zeros((self.latent_dim, Hp), np.float32)
        b_in = np.zeros((1, Hp), np.float32)
        w_hid = np.zeros((L, Hp, Hp), np.float32)
        b_hid = np.zeros((L, 1, Hp), np.float32)
        gamma = np.zeros((1, Hp), np.float32)
        beta = np.zeros((1, Hp), np.float32)
        w_out = np.zeros((Hp, OUTp), np.float32)
        b_out = np.zeros((1, OUTp), np.float32)

        for i, name in enumerate(names):
            p = self.head_params[name]
            c0, c1 = i * H, (i + 1) * H
            o0, o1 = int(offs[i]), int(offs[i + 1])
            w_in[:, c0:c1] = np.asarray(p["w_in"])
            b_in[:, c0:c1] = np.asarray(p["b_in"])
            w_hid[:, c0:c1, c0:c1] = np.asarray(p["w_hid"])   # block-diagonal
            b_hid[:, :, c0:c1] = np.asarray(p["b_hid"])
            gamma[:, c0:c1] = np.asarray(p["gamma"])
            beta[:, c0:c1] = np.asarray(p["beta"])
            w_out[c0:c1, o0:o1] = np.asarray(p["w_out"])
            b_out[:, o0:o1] = np.asarray(p["b_out"])

        # Group-averaging matrix: 1/H inside each HxH diagonal block.
        idx = np.arange(Hp)
        gavg = (idx[:, None] // H == idx[None, :] // H).astype(np.float32) / H

        self.packed = {k: jnp.asarray(v) for k, v in dict(
            w_in=w_in, b_in=b_in, w_hid=w_hid, b_hid=b_hid,
            gamma=gamma, beta=beta, gavg=gavg,
            w_out=w_out, b_out=b_out).items()}

    def __call__(self, x, tm=None):
        batch, n_ev, latent = x.shape
        assert latent == self.latent_dim
        M = batch * n_ev
        x2d = x.reshape(M, latent)
        if tm is None:
            # Row tile: multiple of 8; capped at 512 so double-buffered x/out
            # tiles stay small even on v7x's 64 MiB VMEM (weights ~0.5 MB total
            # stay resident via constant index_maps).
            tm = min(512, _round_up(M, 8))
        y = run_fused(x2d, self.packed, self.n_layers, tm)
        outs = {}
        for name, shape in self.shapes.items():
            off, od = self.out_offsets[name]
            outs[name] = y[:, off:off + od].reshape(batch, n_ev, *shape)
        return outs

    # pure-JAX reference (per-head, unpacked) for verification
    def reference(self, x):
        batch, n_ev, latent = x.shape
        x2d = x.reshape(batch * n_ev, latent)
        outs = {}
        for name, shape in self.shapes.items():
            p = self.head_params[name]
            h = x2d @ p["w_in"] + p["b_in"]
            for l in range(self.n_layers):
                h = h @ p["w_hid"][l] + p["b_hid"][l]
                h = jnp.where(h > 0, h, 0.2 * h)
                mean = jnp.mean(h, axis=-1, keepdims=True)
                var = jnp.mean(jnp.square(h - mean), axis=-1, keepdims=True)
                h = (h - mean) * jax.lax.rsqrt(var + 1e-5)
                h = h * p["gamma"] + p["beta"]
            y = h @ p["w_out"] + p["b_out"]
            outs[name] = y.reshape(batch, n_ev, *shape)
        return outs


# -----------------------------------------------------------------------------
if __name__ == "__main__":
    n_events = 16
    batch = 2
    latent_dim = 16
    hidden_channels = 32
    n_layers = 2
    shapes = {
        "amplitudes": (1,),
        "envelopes": (16, 8),
        "positions": (4,),
    }

    key = jax.random.PRNGKey(0)
    k_param, k_x = jax.random.split(key)

    model = MultiHeadTransformPallas(latent_dim, hidden_channels, shapes,
                                     n_layers, k_param)

    x = jax.random.normal(k_x, (batch, n_events, latent_dim), dtype=jnp.float32)

    out = model(x)
    for name in shapes:
        jax.block_until_ready(out[name])

    # verify shapes + numerics against the pure-JAX reference
    ref = model.reference(x)
    for name, shape in shapes.items():
        assert out[name].shape == (batch, n_events, *shape), out[name].shape
        np.testing.assert_allclose(np.asarray(out[name]), np.asarray(ref[name]),
                                   rtol=1e-4, atol=1e-4)

    print("KERNEL_OK")
</pallas_src>

<mosaic_0001>
module attributes {stable_mosaic.version = 11 : i64} {
  func.func @_fused_heads_kernel(%arg0: i32, %arg1: memref<32x16xf32, #tpu.memory_space<vmem>>, %arg2: memref<16x128xf32, #tpu.memory_space<vmem>>, %arg3: memref<1x128xf32, #tpu.memory_space<vmem>>, %arg4: memref<2x128x128xf32, #tpu.memory_space<vmem>>, %arg5: memref<2x1x128xf32, #tpu.memory_space<vmem>>, %arg6: memref<1x128xf32, #tpu.memory_space<vmem>>, %arg7: memref<1x128xf32, #tpu.memory_space<vmem>>, %arg8: memref<128x128xf32, #tpu.memory_space<vmem>>, %arg9: memref<128x256xf32, #tpu.memory_space<vmem>>, %arg10: memref<1x256xf32, #tpu.memory_space<vmem>>, %arg11: memref<32x256xf32, #tpu.memory_space<vmem>>) attributes {dimension_semantics = [#tpu.dimension_semantics<parallel>], iteration_bounds = array<i64: 1>, scalar_prefetch = 0 : i64, scratch_operands = 0 : i64, tpu.core_type = #tpu.core_type<tc>, window_params = [{transform_indices = @transform_0, window_bounds = array<i64: 32, 16>}, {pipeline_mode = #tpu.pipeline_mode<synchronous>, transform_indices = @transform_1, window_bounds = array<i64: 16, 128>}, {pipeline_mode = #tpu.pipeline_mode<synchronous>, transform_indices = @transform_2, window_bounds = array<i64: 1, 128>}, {pipeline_mode = #tpu.pipeline_mode<synchronous>, transform_indices = @transform_3, window_bounds = array<i64: 2, 128, 128>}, {pipeline_mode = #tpu.pipeline_mode<synchronous>, transform_indices = @transform_4, window_bounds = array<i64: 2, 1, 128>}, {pipeline_mode = #tpu.pipeline_mode<synchronous>, transform_indices = @transform_5, window_bounds = array<i64: 1, 128>}, {pipeline_mode = #tpu.pipeline_mode<synchronous>, transform_indices = @transform_6, window_bounds = array<i64: 1, 128>}, {pipeline_mode = #tpu.pipeline_mode<synchronous>, transform_indices = @transform_7, window_bounds = array<i64: 128, 128>}, {pipeline_mode = #tpu.pipeline_mode<synchronous>, transform_indices = @transform_8, window_bounds = array<i64: 128, 256>}, {pipeline_mode = #tpu.pipeline_mode<synchronous>, transform_indices = @transform_9, window_bounds = array<i64: 1, 256>}, {transform_indices = @transform_10, window_bounds = array<i64: 32, 256>}]} {
    %c0 = arith.constant 0 : index
    %c0_0 = arith.constant 0 : index
    %0 = vector.load %arg3[%c0, %c0_0] : memref<1x128xf32, #tpu.memory_space<vmem>>, vector<1x128xf32>
    %c0_1 = arith.constant 0 : index
    %c0_2 = arith.constant 0 : index
    %1 = vector.load %arg6[%c0_1, %c0_2] : memref<1x128xf32, #tpu.memory_space<vmem>>, vector<1x128xf32>
    %c0_3 = arith.constant 0 : index
    %c0_4 = arith.constant 0 : index
    %2 = vector.load %arg7[%c0_3, %c0_4] : memref<1x128xf32, #tpu.memory_space<vmem>>, vector<1x128xf32>
    %c0_5 = arith.constant 0 : index
    %c0_6 = arith.constant 0 : index
    %3 = vector.load %arg8[%c0_5, %c0_6] : memref<128x128xf32, #tpu.memory_space<vmem>>, vector<128x128xf32>
    %c0_7 = arith.constant 0 : index
    %c0_8 = arith.constant 0 : index
    %c0_9 = arith.constant 0 : index
    %4 = vector.load %arg5[%c0_7, %c0_8, %c0_9] : memref<2x1x128xf32, #tpu.memory_space<vmem>>, vector<2x1x128xf32>
    %c0_10 = arith.constant 0 : index
    %c0_11 = arith.constant 0 : index
    %5 = vector.load %arg1[%c0_10, %c0_11] : memref<32x16xf32, #tpu.memory_space<vmem>>, vector<32x16xf32>
    %c0_12 = arith.constant 0 : index
    %c0_13 = arith.constant 0 : index
    %6 = vector.load %arg2[%c0_12, %c0_13] : memref<16x128xf32, #tpu.memory_space<vmem>>, vector<16x128xf32>
    %cst = arith.constant dense<0.000000e+00> : vector<32x128xf32>
    %7 = tpu.matmul %5, %6, %cst {dimension_numbers = #tpu.dot_dimension_numbers<[1], [0], [0], [1], [0, 0, 1, 1], [], []>} : vector<32x16xf32>, vector<16x128xf32>, vector<32x128xf32> -> vector<32x128xf32>
    %8 = vector.broadcast %0 : vector<1x128xf32> to vector<32x128xf32>
    %9 = arith.addf %7, %8 : vector<32x128xf32>
    %c0_14 = arith.constant 0 : index
    %c0_15 = arith.constant 0 : index
    %c0_16 = arith.constant 0 : index
    %10 = vector.load %arg4[%c0_14, %c0_15, %c0_16] : memref<2x128x128xf32, #tpu.memory_space<vmem>>, vector<1x128x128xf32>
    %11 = vector.shape_cast %10 : vector<1x128x128xf32> to vector<128x128xf32>
    %cst_17 = arith.constant dense<0.000000e+00> : vector<32x128xf32>
    %12 = tpu.matmul %9, %11, %cst_17 {dimension_numbers = #tpu.dot_dimension_numbers<[1], [0], [0], [1], [0, 0, 1, 1], [], []>} : vector<32x128xf32>, vector<128x128xf32>, vector<32x128xf32> -> vector<32x128xf32>
    %13 = vector.extract_strided_slice %4 {offsets = [0, 0, 0], sizes = [1, 1, 128], strides = [1, 1, 1]} : vector<2x1x128xf32> to vector<1x1x128xf32>
    %14 = vector.shape_cast %13 : vector<1x1x128xf32> to vector<1x128xf32>
    %15 = vector.broadcast %14 : vector<1x128xf32> to vector<32x128xf32>
    %16 = arith.addf %12, %15 : vector<32x128xf32>
    %cst_18 = arith.constant 0.000000e+00 : f32
    %17 = vector.broadcast %cst_18 : f32 to vector<32x128xf32>
    %18 = arith.cmpf ogt, %16, %17 : vector<32x128xf32>
    %cst_19 = arith.constant 2.000000e-01 : f32
    %19 = vector.broadcast %cst_19 : f32 to vector<32x128xf32>
    %20 = arith.mulf %19, %16 : vector<32x128xf32>
    %21 = arith.select %18, %16, %20 : vector<32x128xi1>, vector<32x128xf32>
    %cst_20 = arith.constant dense<0.000000e+00> : vector<32x128xf32>
    %22 = tpu.matmul %21, %3, %cst_20 {dimension_numbers = #tpu.dot_dimension_numbers<[1], [0], [0], [1], [0, 0, 1, 1], [], []>} : vector<32x128xf32>, vector<128x128xf32>, vector<32x128xf32> -> vector<32x128xf32>
    %23 = arith.subf %21, %22 : vector<32x128xf32>
    %24 = arith.mulf %23, %23 : vector<32x128xf32>
    %cst_21 = arith.constant dense<0.000000e+00> : vector<32x128xf32>
    %25 = tpu.matmul %24, %3, %cst_21 {dimension_numbers = #tpu.dot_dimension_numbers<[1], [0], [0], [1], [0, 0, 1, 1], [], []>} : vector<32x128xf32>, vector<128x128xf32>, vector<32x128xf32> -> vector<32x128xf32>
    %cst_22 = arith.constant 9.99999974E-6 : f32
    %26 = vector.broadcast %cst_22 : f32 to vector<32x128xf32>
    %27 = arith.addf %25, %26 : vector<32x128xf32>
    %28 = math.rsqrt %27 : vector<32x128xf32>
    %29 = arith.mulf %23, %28 : vector<32x128xf32>
    %30 = vector.broadcast %1 : vector<1x128xf32> to vector<32x128xf32>
    %31 = arith.mulf %29, %30 : vector<32x128xf32>
    %32 = vector.broadcast %2 : vector<1x128xf32> to vector<32x128xf32>
    %33 = arith.addf %31, %32 : vector<32x128xf32>
    %c1 = arith.constant 1 : index
    %c0_23 = arith.constant 0 : index
    %c0_24 = arith.constant 0 : index
    %34 = vector.load %arg4[%c1, %c0_23, %c0_24] : memref<2x128x128xf32, #tpu.memory_space<vmem>>, vector<1x128x128xf32>
    %35 = vector.shape_cast %34 : vector<1x128x128xf32> to vector<128x128xf32>
    %cst_25 = arith.constant dense<0.000000e+00> : vector<32x128xf32>
    %36 = tpu.matmul %33, %35, %cst_25 {dimension_numbers = #tpu.dot_dimension_numbers<[1], [0], [0], [1], [0, 0, 1, 1], [], []>} : vector<32x128xf32>, vector<128x128xf32>, vector<32x128xf32> -> vector<32x128xf32>
    %37 = vector.extract_strided_slice %4 {offsets = [1, 0, 0], sizes = [1, 1, 128], strides = [1, 1, 1]} : vector<2x1x128xf32> to vector<1x1x128xf32>
    %38 = vector.shape_cast %37 : vector<1x1x128xf32> to vector<1x128xf32>
    %39 = vector.broadcast %38 : vector<1x128xf32> to vector<32x128xf32>
    %40 = arith.addf %36, %39 : vector<32x128xf32>
    %cst_26 = arith.constant 0.000000e+00 : f32
    %41 = vector.broadcast %cst_26 : f32 to vector<32x128xf32>
    %42 = arith.cmpf ogt, %40, %41 : vector<32x128xf32>
    %cst_27 = arith.constant 2.000000e-01 : f32
    %43 = vector.broadcast %cst_27 : f32 to vector<32x128xf32>
    %44 = arith.mulf %43, %40 : vector<32x128xf32>
    %45 = arith.select %42, %40, %44 : vector<32x128xi1>, vector<32x128xf32>
    %cst_28 = arith.constant dense<0.000000e+00> : vector<32x128xf32>
    %46 = tpu.matmul %45, %3, %cst_28 {dimension_numbers = #tpu.dot_dimension_numbers<[1], [0], [0], [1], [0, 0, 1, 1], [], []>} : vector<32x128xf32>, vector<128x128xf32>, vector<32x128xf32> -> vector<32x128xf32>
    %47 = arith.subf %45, %46 : vector<32x128xf32>
    %48 = arith.mulf %47, %47 : vector<32x128xf32>
    %cst_29 = arith.constant dense<0.000000e+00> : vector<32x128xf32>
    %49 = tpu.matmul %48, %3, %cst_29 {dimension_numbers = #tpu.dot_dimension_numbers<[1], [0], [0], [1], [0, 0, 1, 1], [], []>} : vector<32x128xf32>, vector<128x128xf32>, vector<32x128xf32> -> vector<32x128xf32>
    %cst_30 = arith.constant 9.99999974E-6 : f32
    %50 = vector.broadcast %cst_30 : f32 to vector<32x128xf32>
    %51 = arith.addf %49, %50 : vector<32x128xf32>
    %52 = math.rsqrt %51 : vector<32x128xf32>
    %53 = arith.mulf %47, %52 : vector<32x128xf32>
    %54 = vector.broadcast %1 : vector<1x128xf32> to vector<32x128xf32>
    %55 = arith.mulf %53, %54 : vector<32x128xf32>
    %56 = vector.broadcast %2 : vector<1x128xf32> to vector<32x128xf32>
    %57 = arith.addf %55, %56 : vector<32x128xf32>
    %c0_31 = arith.constant 0 : index
    %c0_32 = arith.constant 0 : index
    %58 = vector.load %arg9[%c0_31, %c0_32] : memref<128x256xf32, #tpu.memory_space<vmem>>, vector<128x256xf32>
    %cst_33 = arith.constant dense<0.000000e+00> : vector<32x256xf32>
    %59 = tpu.matmul %57, %58, %cst_33 {dimension_numbers = #tpu.dot_dimension_numbers<[1], [0], [0], [1], [0, 0, 1, 1], [], []>} : vector<32x128xf32>, vector<128x256xf32>, vector<32x256xf32> -> vector<32x256xf32>
    %c0_34 = arith.constant 0 : index
    %c0_35 = arith.constant 0 : index
    %60 = vector.load %arg10[%c0_34, %c0_35] : memref<1x256xf32, #tpu.memory_space<vmem>>, vector<1x256xf32>
    %61 = vector.broadcast %60 : vector<1x256xf32> to vector<32x256xf32>
    %62 = arith.addf %59, %61 : vector<32x256xf32>
    %c0_36 = arith.constant 0 : index
    %c0_37 = arith.constant 0 : index
    %63 = vector.load %arg11[%c0_36, %c0_37] : memref<32x256xf32, #tpu.memory_space<vmem>>, vector<32x256xf32>
    tpu.vector_store %arg11[%c0_36, %c0_37], %62 {strides = array<i32>} : memref<32x256xf32, #tpu.memory_space<vmem>>, vector<32x256xf32>,
    return
  }
  func.func @transform_0(%arg0: i32) -> (i32, i32) {
    %c0_i32 = arith.constant 0 : i32
    %c0_i32_0 = arith.constant 0 : i32
    return %arg0, %c0_i32 : i32, i32
  }
  func.func @transform_1(%arg0: i32) -> (i32, i32) {
    %c0_i32 = arith.constant 0 : i32
    %c0_i32_0 = arith.constant 0 : i32
    %c0_i32_1 = arith.constant 0 : i32
    return %c0_i32, %c0_i32_0 : i32, i32
  }
  func.func @transform_2(%arg0: i32) -> (i32, i32) {
    %c0_i32 = arith.constant 0 : i32
    %c0_i32_0 = arith.constant 0 : i32
    %c0_i32_1 = arith.constant 0 : i32
    return %c0_i32, %c0_i32_0 : i32, i32
  }
  func.func @transform_3(%arg0: i32) -> (i32, i32, i32) {
    %c0_i32 = arith.constant 0 : i32
    %c0_i32_0 = arith.constant 0 : i32
    %c0_i32_1 = arith.constant 0 : i32
    %c0_i32_2 = arith.constant 0 : i32
    return %c0_i32, %c0_i32_0, %c0_i32_1 : i32, i32, i32
  }
  func.func @transform_4(%arg0: i32) -> (i32, i32, i32) {
    %c0_i32 = arith.constant 0 : i32
    %c0_i32_0 = arith.constant 0 : i32
    %c0_i32_1 = arith.constant 0 : i32
    %c0_i32_2 = arith.constant 0 : i32
    return %c0_i32, %c0_i32_0, %c0_i32_1 : i32, i32, i32
  }
  func.func @transform_5(%arg0: i32) -> (i32, i32) {
    %c0_i32 = arith.constant 0 : i32
    %c0_i32_0 = arith.constant 0 : i32
    %c0_i32_1 = arith.constant 0 : i32
    return %c0_i32, %c0_i32_0 : i32, i32
  }
  func.func @transform_6(%arg0: i32) -> (i32, i32) {
    %c0_i32 = arith.constant 0 : i32
    %c0_i32_0 = arith.constant 0 : i32
    %c0_i32_1 = arith.constant 0 : i32
    return %c0_i32, %c0_i32_0 : i32, i32
  }
  func.func @transform_7(%arg0: i32) -> (i32, i32) {
    %c0_i32 = arith.constant 0 : i32
    %c0_i32_0 = arith.constant 0 : i32
    %c0_i32_1 = arith.constant 0 : i32
    return %c0_i32, %c0_i32_0 : i32, i32
  }
  func.func @transform_8(%arg0: i32) -> (i32, i32) {
    %c0_i32 = arith.constant 0 : i32
    %c0_i32_0 = arith.constant 0 : i32
    %c0_i32_1 = arith.constant 0 : i32
    return %c0_i32, %c0_i32_0 : i32, i32
  }
  func.func @transform_9(%arg0: i32) -> (i32, i32) {
    %c0_i32 = arith.constant 0 : i32
    %c0_i32_0 = arith.constant 0 : i32
    %c0_i32_1 = arith.constant 0 : i32
    return %c0_i32, %c0_i32_0 : i32, i32
  }
  func.func @transform_10(%arg0: i32) -> (i32, i32) {
    %c0_i32 = arith.constant 0 : i32
    %c0_i32_0 = arith.constant 0 : i32
    return %arg0, %c0_i32 : i32, i32
  }
}

</mosaic_0001>

<llo_original>
// kernel: tpu_custom_call.1
$region0: #{tpu_custom_call.1}
  #allocation0 [shape = 'u32[]', space=smem, size = 0x4, offset = 0x4, fixed_abs, tag = 'smem constant byte address 0x4 - core index']
  #allocation1 [shape = 'u32[144,128]{1,0:T(1,128)}', space=vmem, size = 0x12000, scoped, tag = 'internal scratch']
  %s0 = inlined_call_operand.vmem [shape: f32[32,16], index: 0, kind: input, shape index: {}]
  %s1 = inlined_call_operand.vmem [shape: f32[16,128], index: 1, kind: input, shape index: {}]
  %s2 = inlined_call_operand.vmem [shape: f32[1,128], index: 2, kind: input, shape index: {}]
  %s3 = inlined_call_operand.hbm [shape: f32[2,128,128], index: 3, kind: input, shape index: {}]
  %s4 = inlined_call_operand.vmem [shape: f32[2,1,128], index: 4, kind: input, shape index: {}]
  %s5 = inlined_call_operand.vmem [shape: f32[1,128], index: 5, kind: input, shape index: {}]
  %s6 = inlined_call_operand.vmem [shape: f32[1,128], index: 6, kind: input, shape index: {}]
  %s7 = inlined_call_operand.hbm [shape: f32[128,128], index: 7, kind: input, shape index: {}]
  %s8 = inlined_call_operand.hbm [shape: f32[128,256], index: 8, kind: input, shape index: {}]
  %s9 = inlined_call_operand.vmem [shape: f32[1,256], index: 9, kind: input, shape index: {}]
  %s10 = inlined_call_operand.hbm [shape: f32[32,256], index: 10, kind: output, shape index: {}]
  %s11 = sld [smem:[#allocation0]]
  $region62: #{tpu_custom_call.1} parent=0
    _
  %s13 = ssub.s32 1, %s11
  %s14 = scalar_select 0, %s13, %s11
  $region1: #{tpu_custom_call.1} parent=0
    #allocation2 [shape = 'u8[131072]{0}', space=vmem, size = 0x20000, scoped, tag = 'input window, operand 3, single buffered']
    #allocation3 [shape = 's32[1]{0}', space=sflag, size = 0x4, scoped, tag = 'scoped memory for tpu_custom_call.1']
    #allocation4 [shape = 's32[1]{0}', space=sflag, size = 0x4, scoped, tag = 'scoped memory for tpu_custom_call.1']
    #allocation5 [shape = 'u8[65536]{0}', space=vmem, size = 0x10000, scoped, tag = 'input window, operand 7, single buffered']
    #allocation6 [shape = 's32[1]{0}', space=sflag, size = 0x4, scoped, tag = 'scoped memory for tpu_custom_call.1']
    #allocation7 [shape = 'u8[131072]{0}', space=vmem, size = 0x20000, scoped, tag = 'input window, operand 8, single buffered']
    #allocation8 [shape = 'u8[32768]{0}', space=vmem, size = 0x8000, scoped, tag = 'output window, operand 0, single buffered']
    %15 = vsyncpa [#allocation3], 0
    %16 = vsyncpa [#allocation6], 0
    %17 = vsyncpa [#allocation4], 0
    // Predicated region
    $region2: #{tpu_custom_call.1} parent=1 // pred_check
      _
    $region3: #{tpu_custom_call.1} parent=1 // pred_check_branch
      %19 = sbr.rel (0) target = $region5
    $region4: #{tpu_custom_call.1} parent=1 // pred_region
      _
    $region5: #{tpu_custom_call.1} parent=1 // pred_fallthru
      _
    // Predicated region
    $region6: #{tpu_custom_call.1} parent=1 // pred_check
      _
    $region7: #{tpu_custom_call.1} parent=1 // pred_check_branch
      %21 = sbr.rel (0) target = $region9
    $region8: #{tpu_custom_call.1} parent=1 // pred_region
      _
    $region9: #{tpu_custom_call.1} parent=1 // pred_fallthru
      _
    // Predicated region
    $region10: #{tpu_custom_call.1} parent=1 // pred_check
      _
    $region11: #{tpu_custom_call.1} parent=1 // pred_check_branch
      %23 = sbr.rel (0) target = $region13
    $region12: #{tpu_custom_call.1} parent=1 // pred_region
      _
    $region13: #{tpu_custom_call.1} parent=1 // pred_fallthru
      _
    // Predicated region
    $region14: #{tpu_custom_call.1} parent=1 // pred_check
      _
    $region15: #{tpu_custom_call.1} parent=1 // pred_check_branch
      %25 = sbr.rel (0) target = $region17
    $region16: #{tpu_custom_call.1} parent=1 // pred_region
      %s27 = ssub.s32 4096, 4096
      %28 = vsyncadd [#allocation3], %s27
      %s29 = sshll.u32 [#allocation2], 4
      %s30 = int_to_ptr.vmem [resolvable:$true] %s29
      %35 = dma.hbm_to_vmem [thread:$0]  %s3, 4096, %s30, [#allocation3], 128, 128, 8
    $region17: #{tpu_custom_call.1} parent=1 // pred_fallthru
      _
    // Predicated region
    $region18: #{tpu_custom_call.1} parent=1 // pred_check
      _
    $region19: #{tpu_custom_call.1} parent=1 // pred_check_branch
      %37 = sbr.rel (0) target = $region21
    $region20: #{tpu_custom_call.1} parent=1 // pred_region
      _
    $region21: #{tpu_custom_call.1} parent=1 // pred_fallthru
      _
    // Predicated region
    $region22: #{tpu_custom_call.1} parent=1 // pred_check
      _
    $region23: #{tpu_custom_call.1} parent=1 // pred_check_branch
      %39 = sbr.rel (0) target = $region25
    $region24: #{tpu_custom_call.1} parent=1 // pred_region
      _
    $region25: #{tpu_custom_call.1} parent=1 // pred_fallthru
      _
    // Predicated region
    $region26: #{tpu_custom_call.1} parent=1 // pred_check
      _
    $region27: #{tpu_custom_call.1} parent=1 // pred_check_branch
      %41 = sbr.rel (0) target = $region29
    $region28: #{tpu_custom_call.1} parent=1 // pred_region
      _
    $region29: #{tpu_custom_call.1} parent=1 // pred_fallthru
      _
    // Predicated region
    $region30: #{tpu_custom_call.1} parent=1 // pred_check
      _
    $region31: #{tpu_custom_call.1} parent=1 // pred_check_branch
      %43 = sbr.rel (0) target = $region33
    $region32: #{tpu_custom_call.1} parent=1 // pred_region
      %s45 = ssub.s32 2048, 2048
      %46 = vsyncadd [#allocation6], %s45
      %s47 = sshll.u32 [#allocation5], 4
      %s48 = int_to_ptr.vmem [resolvable:$true] %s47
      %53 = dma.hbm_to_vmem [thread:$0]  %s7, 2048, %s48, [#allocation6], 128, 128, 8
    $region33: #{tpu_custom_call.1} parent=1 // pred_fallthru
      _
    // Predicated region
    $region34: #{tpu_custom_call.1} parent=1 // pred_check
      _
    $region35: #{tpu_custom_call.1} parent=1 // pred_check_branch
      %55 = sbr.rel (0) target = $region37
    $region36: #{tpu_custom_call.1} parent=1 // pred_region
      %s57 = ssub.s32 4096, 4096
      %58 = vsyncadd [#allocation6], %s57
      %s59 = sshll.u32 [#allocation7], 4
      %s60 = int_to_ptr.vmem [resolvable:$true] %s59
      %65 = dma.hbm_to_vmem [thread:$0]  %s8, 4096, %s60, [#allocation6], 256, 256, 16
    $region37: #{tpu_custom_call.1} parent=1 // pred_fallthru
      _
    // Predicated region
    $region38: #{tpu_custom_call.1} parent=1 // pred_check
      _
    $region39: #{tpu_custom_call.1} parent=1 // pred_check_branch
      %67 = sbr.rel (0) target = $region41
    $region40: #{tpu_custom_call.1} parent=1 // pred_region
      _
    $region41: #{tpu_custom_call.1} parent=1 // pred_fallthru
      _
    // Predicated region
    $region42: #{tpu_custom_call.1} parent=1 // pred_check
      _
    $region43: #{tpu_custom_call.1} parent=1 // pred_check_branch
      %69 = sbr.rel (0) target = $region45
    $region44: #{tpu_custom_call.1} parent=1 // pred_region
      %70 = dma.done [#allocation3], 4096
    $region45: #{tpu_custom_call.1} parent=1 // pred_fallthru
      _
    // Predicated region
    $region46: #{tpu_custom_call.1} parent=1 // pred_check
      _
    $region47: #{tpu_custom_call.1} parent=1 // pred_check_branch
      %72 = sbr.rel (0) target = $region49
    $region48: #{tpu_custom_call.1} parent=1 // pred_region
      %73 = dma.done [#allocation6], 2048
    $region49: #{tpu_custom_call.1} parent=1 // pred_fallthru
      _
    // Predicated region
    $region50: #{tpu_custom_call.1} parent=1 // pred_check
      _
    $region51: #{tpu_custom_call.1} parent=1 // pred_check_branch
      %75 = sbr.rel (0) target = $region53
    $region52: #{tpu_custom_call.1} parent=1 // pred_region
      %76 = dma.done [#allocation6], 4096
    $region53: #{tpu_custom_call.1} parent=1 // pred_fallthru
      _
    %v77 = vld [vmem:[%s2] sm:$0x1]
    %v78 = vld [vmem:[%s5] sm:$0x1]
    %v79 = vld [vmem:[%s6] sm:$0x1]
    %v80 = vld [vmem:[#allocation5] sm:$0xff]
    %v81 = vld [vmem:[#allocation5 + $0x8] sm:$0xff]
    %v82 = vld [vmem:[#allocation5 + $0x10] sm:$0xff]
    %v83 = vld [vmem:[#allocation5 + $0x18] sm:$0xff]
    %v84 = vld [vmem:[#allocation5 + $0x20] sm:$0xff]
    %v85 = vld [vmem:[#allocation5 + $0x28] sm:$0xff]
    %v86 = vld [vmem:[#allocation5 + $0x30] sm:$0xff]
    %v87 = vld [vmem:[#allocation5 + $0x38] sm:$0xff]
    %v88 = vld [vmem:[#allocation5 + $0x40] sm:$0xff]
    %v89 = vld [vmem:[#allocation5 + $0x48] sm:$0xff]
    %v90 = vld [vmem:[#allocation5 + $0x50] sm:$0xff]
    %v91 = vld [vmem:[#allocation5 + $0x58] sm:$0xff]
    %v92 = vld [vmem:[#allocation5 + $0x60] sm:$0xff]
    %v93 = vld [vmem:[#allocation5 + $0x68] sm:$0xff]
    %v94 = vld [vmem:[#allocation5 + $0x70] sm:$0xff]
    %v95 = vld [vmem:[#allocation5 + $0x78] sm:$0xff]
    %v96 = vld [vmem:[%s4] sm:$0x1]
    %v97 = vld [vmem:[%s4 + $0x1] sm:$0x1]
    %v98 = vld [vmem:[%s0] sm:$0xff]
    %v99 = vld [vmem:[%s0 + $0x8] sm:$0xff]
    %v100 = vld [vmem:[%s0 + $0x10] sm:$0xff]
    %v101 = vld [vmem:[%s0 + $0x18] sm:$0xff]
    %v102 = vld [vmem:[%s1] sm:$0xff]
    %v103 = vld [vmem:[%s1 + $0x8] sm:$0xff]
    %v105 = vlaneseq
    %v106 = vshrl.u32 %v105, 7
    %v107 = vsub.s32 0, %v106
    %v108 = vrot.slane %v77, %v107
    %vm110 = vcmask 130048
    %v112 = vsel %vm110, %v98, 0
    %v115 = vsel %vm110, %v99, 0
    %v118 = vsel %vm110, %v100, 0
    %v121 = vsel %vm110, %v101, 0
    %123 = vmatprep.subr.mxu0 0.0
    %124 = vmatpush1.msra.mxu0 0.0
    %125 = vmatprep.subr.mxu0 0.0
    %126 = vmatpush1.msra.mxu0 0.0
    %127 = vmatprep.subr.mxu0 0.0
    %128 = vmatpush1.msra.mxu0 0.0
    %129 = vmatprep.subr.mxu0 0.0
    %130 = vmatpush1.msra.mxu0 0.0
    %131 = vmatprep.subr.mxu0 0.0
    %132 = vmatpush1.msra.mxu0 0.0
    %133 = vmatprep.subr.mxu0 0.0
    %134 = vmatpush1.msra.mxu0 0.0
    %135 = vmatprep.subr.mxu0 0.0
    %136 = vmatpush1.msra.mxu0 0.0
    %137 = vmatprep.subr.mxu0 0.0
    %138 = vmatpush1.msra.mxu0 0.0
    %139 = vmatprep.subr.mxu0 0.0
    %140 = vmatpush1.msra.mxu0 0.0
    %141 = vmatprep.subr.mxu0 0.0
    %142 = vmatpush1.msra.mxu0 0.0
    %143 = vmatprep.subr.mxu0 0.0
    %144 = vmatpush1.msra.mxu0 0.0
    %145 = vmatprep.subr.mxu0 0.0
    %146 = vmatpush1.msra.mxu0 0.0
    %147 = vmatprep.subr.mxu0 0.0
    %148 = vmatpush1.msra.mxu0 0.0
    %149 = vmatprep.subr.mxu0 0.0
    %150 = vmatpush1.msra.mxu0 0.0
    %151 = vmatprep.subr.mxu0 0.0
    %152 = vmatpush1.msra.mxu0 %v103
    %153 = vmatprep.subr.mxu0 0.0
    %154 = vmatpush1.msra.mxu0 %v102
    %155 = vmatprep.subr.mxu0 0.0
    %156 = vmatpush2.msra.mxu0 0.0
    %157 = vmatprep.subr.mxu0 0.0
    %158 = vmatpush2.msra.mxu0 0.0
    %159 = vmatprep.subr.mxu0 0.0
    %160 = vmatpush2.msra.mxu0 0.0
    %161 = vmatprep.subr.mxu0 0.0
    %162 = vmatpush2.msra.mxu0 0.0
    %163 = vmatprep.subr.mxu0 0.0
    %164 = vmatpush2.msra.mxu0 0.0
    %165 = vmatprep.subr.mxu0 0.0
    %166 = vmatpush2.msra.mxu0 0.0
    %167 = vmatprep.subr.mxu0 0.0
    %168 = vmatpush2.msra.mxu0 0.0
    %169 = vmatprep.subr.mxu0 0.0
    %170 = vmatpush2.msra.mxu0 0.0
    %171 = vmatprep.subr.mxu0 0.0
    %172 = vmatpush2.msra.mxu0 0.0
    %173 = vmatprep.subr.mxu0 0.0
    %174 = vmatpush2.msra.mxu0 0.0
    %175 = vmatprep.subr.mxu0 0.0
    %176 = vmatpush2.msra.mxu0 0.0
    %177 = vmatprep.subr.mxu0 0.0
    %178 = vmatpush2.msra.mxu0 0.0
    %179 = vmatprep.subr.mxu0 0.0
    %180 = vmatpush2.msra.mxu0 0.0
    %181 = vmatprep.subr.mxu0 0.0
    %182 = vmatpush2.msra.mxu0 0.0
    %183 = vmatprep.subr.mxu0 0.0
    %184 = vmatpush2.msra.mxu0 0.0
    %185 = vmatprep.subr.mxu0 0.0
    %186 = vmatpush2.msra.mxu0 0.0
    %187 = vmatprep.mubr.f32.mxu0 0.0
    %188 = vmatmul.mubr.f32.gmra.mxu0 %v112
    %v189 = vpop.f32.mrf.mxu0
    %v190 = vadd.f32 %v108, %v189
    %v191 = vpop.f32.mrf.mxu0
    %192 = vmatprep.mubr.f32.mxu0 0.0
    %193 = vmatmul.mubr.f32.gmra.mxu0 %v115
    %v194 = vpop.f32.mrf.mxu0
    %v195 = vadd.f32 %v108, %v194
    %v196 = vpop.f32.mrf.mxu0
    %197 = vmatprep.mubr.f32.mxu0 0.0
    %198 = vmatmul.mubr.f32.gmra.mxu0 %v118
    %v199 = vpop.f32.mrf.mxu0
    %v200 = vadd.f32 %v108, %v199
    %v201 = vpop.f32.mrf.mxu0
    %202 = vmatprep.mubr.f32.mxu0 0.0
    %203 = vmatmul.mubr.f32.gmra.mxu0 %v121
    %v204 = vpop.f32.mrf.mxu0
    %v205 = vadd.f32 %v108, %v204
    %v206 = vpop.f32.mrf.mxu0
    %207 = vdwg.mxu0
    %v208 = vld [vmem:[#allocation2] sm:$0xff]
    %v209 = vld [vmem:[#allocation2 + $0x8] sm:$0xff]
    %v210 = vld [vmem:[#allocation2 + $0x10] sm:$0xff]
    %v211 = vld [vmem:[#allocation2 + $0x18] sm:$0xff]
    %v212 = vld [vmem:[#allocation2 + $0x20] sm:$0xff]
    %v213 = vld [vmem:[#allocation2 + $0x28] sm:$0xff]
    %v214 = vld [vmem:[#allocation2 + $0x30] sm:$0xff]
    %v215 = vld [vmem:[#allocation2 + $0x38] sm:$0xff]
    %v216 = vld [vmem:[#allocation2 + $0x40] sm:$0xff]
    %v217 = vld [vmem:[#allocation2 + $0x48] sm:$0xff]
    %v218 = vld [vmem:[#allocation2 + $0x50] sm:$0xff]
    %v219 = vld [vmem:[#allocation2 + $0x58] sm:$0xff]
    %v220 = vld [vmem:[#allocation2 + $0x60] sm:$0xff]
    %v221 = vld [vmem:[#allocation2 + $0x68] sm:$0xff]
    %v222 = vld [vmem:[#allocation2 + $0x70] sm:$0xff]
    %v223 = vld [vmem:[#allocation2 + $0x78] sm:$0xff]
    %v225 = vlaneseq
    %v226 = vshrl.u32 %v225, 7
    %v227 = vsub.s32 0, %v226
    %v228 = vrot.slane %v96, %v227
    %230 = vmatprep.subr.mxu0 0.0
    %231 = vmatpush1.msra.mxu0 %v223
    %232 = vmatprep.subr.mxu0 0.0
    %233 = vmatpush1.msra.mxu0 %v222
    %234 = vmatprep.subr.mxu0 0.0
    %235 = vmatpush1.msra.mxu0 %v221
    %236 = vmatprep.subr.mxu0 0.0
    %237 = vmatpush1.msra.mxu0 %v220
    %238 = vmatprep.subr.mxu0 0.0
    %239 = vmatpush1.msra.mxu0 %v219
    %240 = vmatprep.subr.mxu0 0.0
    %241 = vmatpush1.msra.mxu0 %v218
    %242 = vmatprep.subr.mxu0 0.0
    %243 = vmatpush1.msra.mxu0 %v217
    %244 = vmatprep.subr.mxu0 0.0
    %245 = vmatpush1.msra.mxu0 %v216
    %246 = vmatprep.subr.mxu0 0.0
    %247 = vmatpush1.msra.mxu0 %v215
    %248 = vmatprep.subr.mxu0 0.0
    %249 = vmatpush1.msra.mxu0 %v214
    %250 = vmatprep.subr.mxu0 0.0
    %251 = vmatpush1.msra.mxu0 %v213
    %252 = vmatprep.subr.mxu0 0.0
    %253 = vmatpush1.msra.mxu0 %v212
    %254 = vmatprep.subr.mxu0 0.0
    %255 = vmatpush1.msra.mxu0 %v211
    %256 = vmatprep.subr.mxu0 0.0
    %257 = vmatpush1.msra.mxu0 %v210
    %258 = vmatprep.subr.mxu0 0.0
    %259 = vmatpush1.msra.mxu0 %v209
    %260 = vmatprep.subr.mxu0 0.0
    %261 = vmatpush1.msra.mxu0 %v208
    %262 = vmatprep.subr.mxu0 0.0
    %263 = vmatpush2.msra.mxu0 0.0
    %264 = vmatprep.subr.mxu0 0.0
    %265 = vmatpush2.msra.mxu0 0.0
    %266 = vmatprep.subr.mxu0 0.0
    %267 = vmatpush2.msra.mxu0 0.0
    %268 = vmatprep.subr.mxu0 0.0
    %269 = vmatpush2.msra.mxu0 0.0
    %270 = vmatprep.subr.mxu0 0.0
    %271 = vmatpush2.msra.mxu0 0.0
    %272 = vmatprep.subr.mxu0 0.0
    %273 = vmatpush2.msra.mxu0 0.0
    %274 = vmatprep.subr.mxu0 0.0
    %275 = vmatpush2.msra.mxu0 0.0
    %276 = vmatprep.subr.mxu0 0.0
    %277 = vmatpush2.msra.mxu0 0.0
    %278 = vmatprep.subr.mxu0 0.0
    %279 = vmatpush2.msra.mxu0 0.0
    %280 = vmatprep.subr.mxu0 0.0
    %281 = vmatpush2.msra.mxu0 0.0
    %282 = vmatprep.subr.mxu0 0.0
    %283 = vmatpush2.msra.mxu0 0.0
    %284 = vmatprep.subr.mxu0 0.0
    %285 = vmatpush2.msra.mxu0 0.0
    %286 = vmatprep.subr.mxu0 0.0
    %287 = vmatpush2.msra.mxu0 0.0
    %288 = vmatprep.subr.mxu0 0.0
    %289 = vmatpush2.msra.mxu0 0.0
    %290 = vmatprep.subr.mxu0 0.0
    %291 = vmatpush2.msra.mxu0 0.0
    %292 = vmatprep.subr.mxu0 0.0
    %293 = vmatpush2.msra.mxu0 0.0
    %294 = vmatprep.mubr.f32.mxu0 0.0
    %295 = vmatmul.mubr.f32.gmra.mxu0 %v190
    %v296 = vpop.f32.mrf.mxu0
    %v297 = vadd.f32 %v228, %v296
    %v298 = vpop.f32.mrf.mxu0
    %299 = vmatprep.mubr.f32.mxu0 0.0
    %300 = vmatmul.mubr.f32.gmra.mxu0 %v195
    %v301 = vpop.f32.mrf.mxu0
    %v302 = vadd.f32 %v228, %v301
    %v303 = vpop.f32.mrf.mxu0
    %304 = vmatprep.mubr.f32.mxu0 0.0
    %305 = vmatmul.mubr.f32.gmra.mxu0 %v200
    %v306 = vpop.f32.mrf.mxu0
    %v307 = vadd.f32 %v228, %v306
    %v308 = vpop.f32.mrf.mxu0
    %309 = vmatprep.mubr.f32.mxu0 0.0
    %310 = vmatmul.mubr.f32.gmra.mxu0 %v205
    %v311 = vpop.f32.mrf.mxu0
    %v312 = vadd.f32 %v228, %v311
    %v313 = vpop.f32.mrf.mxu0
    %314 = vdwg.mxu0
    %vm315 = vcmp.gt.f32.partialorder %v297, 0.0
    %vm316 = vcmp.gt.f32.partialorder %v302, 0.0
    %vm317 = vcmp.gt.f32.partialorder %v307, 0.0
    %vm318 = vcmp.gt.f32.partialorder %v312, 0.0
    %v319 = vmul.f32 %v297, 0.2
    %v320 = vmul.f32 %v302, 0.2
    %v321 = vmul.f32 %v307, 0.2
    %v322 = vmul.f32 %v312, 0.2
    %v323 = vsel %vm315, %v297, %v319
    %v324 = vsel %vm316, %v302, %v320
    %v325 = vsel %vm317, %v307, %v321
    %v326 = vsel %vm318, %v312, %v322
    %327 = vmatprep.subr.mxu0 0.0
    %328 = vmatpush1.msra.mxu0 %v95
    %329 = vmatprep.subr.mxu0 0.0
    %330 = vmatpush1.msra.mxu0 %v94
    %331 = vmatprep.subr.mxu0 0.0
    %332 = vmatpush1.msra.mxu0 %v93
    %333 = vmatprep.subr.mxu0 0.0
    %334 = vmatpush1.msra.mxu0 %v92
    %335 = vmatprep.subr.mxu0 0.0
    %336 = vmatpush1.msra.mxu0 %v91
    %337 = vmatprep.subr.mxu0 0.0
    %338 = vmatpush1.msra.mxu0 %v90
    %339 = vmatprep.subr.mxu0 0.0
    %340 = vmatpush1.msra.mxu0 %v89
    %341 = vmatprep.subr.mxu0 0.0
    %342 = vmatpush1.msra.mxu0 %v88
    %343 = vmatprep.subr.mxu0 0.0
    %344 = vmatpush1.msra.mxu0 %v87
    %345 = vmatprep.subr.mxu0 0.0
    %346 = vmatpush1.msra.mxu0 %v86
    %347 = vmatprep.subr.mxu0 0.0
    %348 = vmatpush1.msra.mxu0 %v85
    %349 = vmatprep.subr.mxu0 0.0
    %350 = vmatpush1.msra.mxu0 %v84
    %351 = vmatprep.subr.mxu0 0.0
    %352 = vmatpush1.msra.mxu0 %v83
    %353 = vmatprep.subr.mxu0 0.0
    %354 = vmatpush1.msra.mxu0 %v82
    %355 = vmatprep.subr.mxu0 0.0
    %356 = vmatpush1.msra.mxu0 %v81
    %357 = vmatprep.subr.mxu0 0.0
    %358 = vmatpush1.msra.mxu0 %v80
    %359 = vmatprep.subr.mxu0 0.0
    %360 = vmatpush2.msra.mxu0 0.0
    %361 = vmatprep.subr.mxu0 0.0
    %362 = vmatpush2.msra.mxu0 0.0
    %363 = vmatprep.subr.mxu0 0.0
    %364 = vmatpush2.msra.mxu0 0.0
    %365 = vmatprep.subr.mxu0 0.0
    %366 = vmatpush2.msra.mxu0 0.0
    %367 = vmatprep.subr.mxu0 0.0
    %368 = vmatpush2.msra.mxu0 0.0
    %369 = vmatprep.subr.mxu0 0.0
    %370 = vmatpush2.msra.mxu0 0.0
    %371 = vmatprep.subr.mxu0 0.0
    %372 = vmatpush2.msra.mxu0 0.0
    %373 = vmatprep.subr.mxu0 0.0
    %374 = vmatpush2.msra.mxu0 0.0
    %375 = vmatprep.subr.mxu0 0.0
    %376 = vmatpush2.msra.mxu0 0.0
    %377 = vmatprep.subr.mxu0 0.0
    %378 = vmatpush2.msra.mxu0 0.0
    %379 = vmatprep.subr.mxu0 0.0
    %380 = vmatpush2.msra.mxu0 0.0
    %381 = vmatprep.subr.mxu0 0.0
    %382 = vmatpush2.msra.mxu0 0.0
    %383 = vmatprep.subr.mxu0 0.0
    %384 = vmatpush2.msra.mxu0 0.0
    %385 = vmatprep.subr.mxu0 0.0
    %386 = vmatpush2.msra.mxu0 0.0
    %387 = vmatprep.subr.mxu0 0.0
    %388 = vmatpush2.msra.mxu0 0.0
    %389 = vmatprep.subr.mxu0 0.0
    %390 = vmatpush2.msra.mxu0 0.0
    %391 = vmatprep.mubr.f32.mxu0 0.0
    %392 = vmatmul.mubr.f32.gmra.mxu0 %v323
    %v393 = vpop.f32.mrf.mxu0
    %v394 = vadd.f32 0.0, %v393
    %v395 = vpop.f32.mrf.mxu0
    %396 = vmatprep.mubr.f32.mxu0 0.0
    %397 = vmatmul.mubr.f32.gmra.mxu0 %v324
    %v398 = vpop.f32.mrf.mxu0
    %v399 = vadd.f32 0.0, %v398
    %v400 = vpop.f32.mrf.mxu0
    %401 = vmatprep.mubr.f32.mxu0 0.0
    %402 = vmatmul.mubr.f32.gmra.mxu0 %v325
    %v403 = vpop.f32.mrf.mxu0
    %v404 = vadd.f32 0.0, %v403
    %v405 = vpop.f32.mrf.mxu0
    %406 = vmatprep.mubr.f32.mxu0 0.0
    %407 = vmatmul.mubr.f32.gmra.mxu0 %v326
    %v408 = vpop.f32.mrf.mxu0
    %v409 = vadd.f32 0.0, %v408
    %v410 = vpop.f32.mrf.mxu0
    %411 = vdwg.mxu0
    %v412 = vsub.f32 %v323, %v394
    %v413 = vsub.f32 %v324, %v399
    %v414 = vsub.f32 %v325, %v404
    %v415 = vsub.f32 %v326, %v409
    %v416 = vmul.f32 %v412, %v412
    %v417 = vmul.f32 %v413, %v413
    %v418 = vmul.f32 %v414, %v414
    %v419 = vmul.f32 %v415, %v415
    %420 = vmatprep.subr.mxu0 0.0
    %421 = vmatpush1.msra.mxu0 %v95
    %422 = vmatprep.subr.mxu0 0.0
    %423 = vmatpush1.msra.mxu0 %v94
    %424 = vmatprep.subr.mxu0 0.0
    %425 = vmatpush1.msra.mxu0 %v93
    %426 = vmatprep.subr.mxu0 0.0
    %427 = vmatpush1.msra.mxu0 %v92
    %428 = vmatprep.subr.mxu0 0.0
    %429 = vmatpush1.msra.mxu0 %v91
    %430 = vmatprep.subr.mxu0 0.0
    %431 = vmatpush1.msra.mxu0 %v90
    %432 = vmatprep.subr.mxu0 0.0
    %433 = vmatpush1.msra.mxu0 %v89
    %434 = vmatprep.subr.mxu0 0.0
    %435 = vmatpush1.msra.mxu0 %v88
    %436 = vmatprep.subr.mxu0 0.0
    %437 = vmatpush1.msra.mxu0 %v87
    %438 = vmatprep.subr.mxu0 0.0
    %439 = vmatpush1.msra.mxu0 %v86
    %440 = vmatprep.subr.mxu0 0.0
    %441 = vmatpush1.msra.mxu0 %v85
    %442 = vmatprep.subr.mxu0 0.0
    %443 = vmatpush1.msra.mxu0 %v84
    %444 = vmatprep.subr.mxu0 0.0
    %445 = vmatpush1.msra.mxu0 %v83
    %446 = vmatprep.subr.mxu0 0.0
    %447 = vmatpush1.msra.mxu0 %v82
    %448 = vmatprep.subr.mxu0 0.0
    %449 = vmatpush1.msra.mxu0 %v81
    %450 = vmatprep.subr.mxu0 0.0
    %451 = vmatpush1.msra.mxu0 %v80
    %452 = vmatprep.subr.mxu0 0.0
    %453 = vmatpush2.msra.mxu0 0.0
    %454 = vmatprep.subr.mxu0 0.0
    %455 = vmatpush2.msra.mxu0 0.0
    %456 = vmatprep.subr.mxu0 0.0
    %457 = vmatpush2.msra.mxu0 0.0
    %458 = vmatprep.subr.mxu0 0.0
    %459 = vmatpush2.msra.mxu0 0.0
    %460 = vmatprep.subr.mxu0 0.0
    %461 = vmatpush2.msra.mxu0 0.0
    %462 = vmatprep.subr.mxu0 0.0
    %463 = vmatpush2.msra.mxu0 0.0
    %464 = vmatprep.subr.mxu0 0.0
    %465 = vmatpush2.msra.mxu0 0.0
    %466 = vmatprep.subr.mxu0 0.0
    %467 = vmatpush2.msra.mxu0 0.0
    %468 = vmatprep.subr.mxu0 0.0
    %469 = vmatpush2.msra.mxu0 0.0
    %470 = vmatprep.subr.mxu0 0.0
    %471 = vmatpush2.msra.mxu0 0.0
    %472 = vmatprep.subr.mxu0 0.0
    %473 = vmatpush2.msra.mxu0 0.0
    %474 = vmatprep.subr.mxu0 0.0
    %475 = vmatpush2.msra.mxu0 0.0
    %476 = vmatprep.subr.mxu0 0.0
    %477 = vmatpush2.msra.mxu0 0.0
    %478 = vmatprep.subr.mxu0 0.0
    %479 = vmatpush2.msra.mxu0 0.0
    %480 = vmatprep.subr.mxu0 0.0
    %481 = vmatpush2.msra.mxu0 0.0
    %482 = vmatprep.subr.mxu0 0.0
    %483 = vmatpush2.msra.mxu0 0.0
    %484 = vmatprep.mubr.f32.mxu0 0.0
    %485 = vmatmul.mubr.f32.gmra.mxu0 %v416
    %v486 = vpop.f32.mrf.mxu0
    %v487 = vadd.f32 1e-05, %v486
    %v488 = vpop.f32.mrf.mxu0
    %489 = vmatprep.mubr.f32.mxu0 0.0
    %490 = vmatmul.mubr.f32.gmra.mxu0 %v417
    %v491 = vpop.f32.mrf.mxu0
    %v492 = vadd.f32 1e-05, %v491
    %v493 = vpop.f32.mrf.mxu0
    %494 = vmatprep.mubr.f32.mxu0 0.0
    %495 = vmatmul.mubr.f32.gmra.mxu0 %v418
    %v496 = vpop.f32.mrf.mxu0
    %v497 = vadd.f32 1e-05, %v496
    %v498 = vpop.f32.mrf.mxu0
    %499 = vmatprep.mubr.f32.mxu0 0.0
    %500 = vmatmul.mubr.f32.gmra.mxu0 %v419
    %v501 = vpop.f32.mrf.mxu0
    %v502 = vadd.f32 1e-05, %v501
    %v503 = vpop.f32.mrf.mxu0
    %504 = vdwg.mxu0
    %v505 = vrsqrt.pop %v487
    %v506 = vrsqrt.pop %v492
    %v507 = vrsqrt.pop %v497
    %v508 = vrsqrt.pop %v502
    %v509 = vmul.f32 %v412, %v505
    %v510 = vmul.f32 %v413, %v506
    %v511 = vmul.f32 %v414, %v507
    %v512 = vmul.f32 %v415, %v508
    %v514 = vlaneseq
    %v515 = vshrl.u32 %v514, 7
    %v516 = vsub.s32 0, %v515
    %v517 = vrot.slane %v78, %v516
    %v519 = vmul.f32 %v509, %v517
    %v520 = vmul.f32 %v510, %v517
    %v521 = vmul.f32 %v511, %v517
    %v522 = vmul.f32 %v512, %v517
    %v524 = vlaneseq
    %v525 = vshrl.u32 %v524, 7
    %v526 = vsub.s32 0, %v525
    %v527 = vrot.slane %v79, %v526
    %v529 = vadd.f32 %v519, %v527
    %v530 = vadd.f32 %v520, %v527
    %v531 = vadd.f32 %v521, %v527
    %v532 = vadd.f32 %v522, %v527
    %s533 = scalar_lea.vmem [#allocation2], 128
    %v534 = vld [vmem:[%s533] sm:$0xff]
    %v535 = vld [vmem:[%s533 + $0x8] sm:$0xff]
    %v536 = vld [vmem:[%s533 + $0x10] sm:$0xff]
    %v537 = vld [vmem:[%s533 + $0x18] sm:$0xff]
    %v538 = vld [vmem:[%s533 + $0x20] sm:$0xff]
    %v539 = vld [vmem:[%s533 + $0x28] sm:$0xff]
    %v540 = vld [vmem:[%s533 + $0x30] sm:$0xff]
    %v541 = vld [vmem:[%s533 + $0x38] sm:$0xff]
    %v542 = vld [vmem:[%s533 + $0x40] sm:$0xff]
    %v543 = vld [vmem:[%s533 + $0x48] sm:$0xff]
    %v544 = vld [vmem:[%s533 + $0x50] sm:$0xff]
    %v545 = vld [vmem:[%s533 + $0x58] sm:$0xff]
    %v546 = vld [vmem:[%s533 + $0x60] sm:$0xff]
    %v547 = vld [vmem:[%s533 + $0x68] sm:$0xff]
    %v548 = vld [vmem:[%s533 + $0x70] sm:$0xff]
    %v549 = vld [vmem:[%s533 + $0x78] sm:$0xff]
    %v551 = vlaneseq
    %v552 = vshrl.u32 %v551, 7
    %v553 = vsub.s32 0, %v552
    %v554 = vrot.slane %v97, %v553
    %556 = vmatprep.subr.mxu0 0.0
    %557 = vmatpush1.msra.mxu0 %v549
    %558 = vmatprep.subr.mxu0 0.0
    %559 = vmatpush1.msra.mxu0 %v548
    %560 = vmatprep.subr.mxu0 0.0
    %561 = vmatpush1.msra.mxu0 %v547
    %562 = vmatprep.subr.mxu0 0.0
    %563 = vmatpush1.msra.mxu0 %v546
    %564 = vmatprep.subr.mxu0 0.0
    %565 = vmatpush1.msra.mxu0 %v545
    %566 = vmatprep.subr.mxu0 0.0
    %567 = vmatpush1.msra.mxu0 %v544
    %568 = vmatprep.subr.mxu0 0.0
    %569 = vmatpush1.msra.mxu0 %v543
    %570 = vmatprep.subr.mxu0 0.0
    %571 = vmatpush1.msra.mxu0 %v542
    %572 = vmatprep.subr.mxu0 0.0
    %573 = vmatpush1.msra.mxu0 %v541
    %574 = vmatprep.subr.mxu0 0.0
    %575 = vmatpush1.msra.mxu0 %v540
    %576 = vmatprep.subr.mxu0 0.0
    %577 = vmatpush1.msra.mxu0 %v539
    %578 = vmatprep.subr.mxu0 0.0
    %579 = vmatpush1.msra.mxu0 %v538
    %580 = vmatprep.subr.mxu0 0.0
    %581 = vmatpush1.msra.mxu0 %v537
    %582 = vmatprep.subr.mxu0 0.0
    %583 = vmatpush1.msra.mxu0 %v536
    %584 = vmatprep.subr.mxu0 0.0
    %585 = vmatpush1.msra.mxu0 %v535
    %586 = vmatprep.subr.mxu0 0.0
    %587 = vmatpush1.msra.mxu0 %v534
    %588 = vmatprep.subr.mxu0 0.0
    %589 = vmatpush2.msra.mxu0 0.0
    %590 = vmatprep.subr.mxu0 0.0
    %591 = vmatpush2.msra.mxu0 0.0
    %592 = vmatprep.subr.mxu0 0.0
    %593 = vmatpush2.msra.mxu0 0.0
    %594 = vmatprep.subr.mxu0 0.0
    %595 = vmatpush2.msra.mxu0 0.0
    %596 = vmatprep.subr.mxu0 0.0
    %597 = vmatpush2.msra.mxu0 0.0
    %598 = vmatprep.subr.mxu0 0.0
    %599 = vmatpush2.msra.mxu0 0.0
    %600 = vmatprep.subr.mxu0 0.0
    %601 = vmatpush2.msra.mxu0 0.0
    %602 = vmatprep.subr.mxu0 0.0
    %603 = vmatpush2.msra.mxu0 0.0
    %604 = vmatprep.subr.mxu0 0.0
    %605 = vmatpush2.msra.mxu0 0.0
    %606 = vmatprep.subr.mxu0 0.0
    %607 = vmatpush2.msra.mxu0 0.0
    %608 = vmatprep.subr.mxu0 0.0
    %609 = vmatpush2.msra.mxu0 0.0
    %610 = vmatprep.subr.mxu0 0.0
    %611 = vmatpush2.msra.mxu0 0.0
    %612 = vmatprep.subr.mxu0 0.0
    %613 = vmatpush2.msra.mxu0 0.0
    %614 = vmatprep.subr.mxu0 0.0
    %615 = vmatpush2.msra.mxu0 0.0
    %616 = vmatprep.subr.mxu0 0.0
    %617 = vmatpush2.msra.mxu0 0.0
    %618 = vmatprep.subr.mxu0 0.0
    %619 = vmatpush2.msra.mxu0 0.0
    %620 = vmatprep.mubr.f32.mxu0 0.0
    %621 = vmatmul.mubr.f32.gmra.mxu0 %v529
    %v622 = vpop.f32.mrf.mxu0
    %v623 = vadd.f32 %v554, %v622
    %v624 = vpop.f32.mrf.mxu0
    %625 = vmatprep.mubr.f32.mxu0 0.0
    %626 = vmatmul.mubr.f32.gmra.mxu0 %v530
    %v627 = vpop.f32.mrf.mxu0
    %v628 = vadd.f32 %v554, %v627
    %v629 = vpop.f32.mrf.mxu0
    %630 = vmatprep.mubr.f32.mxu0 0.0
    %631 = vmatmul.mubr.f32.gmra.mxu0 %v531
    %v632 = vpop.f32.mrf.mxu0
    %v633 = vadd.f32 %v554, %v632
    %v634 = vpop.f32.mrf.mxu0
    %635 = vmatprep.mubr.f32.mxu0 0.0
    %636 = vmatmul.mubr.f32.gmra.mxu0 %v532
    %v637 = vpop.f32.mrf.mxu0
    %v638 = vadd.f32 %v554, %v637
    %v639 = vpop.f32.mrf.mxu0
    %640 = vdwg.mxu0
    %vm641 = vcmp.gt.f32.partialorder %v623, 0.0
    %vm642 = vcmp.gt.f32.partialorder %v628, 0.0
    %vm643 = vcmp.gt.f32.partialorder %v633, 0.0
    %vm644 = vcmp.gt.f32.partialorder %v638, 0.0
    %v645 = vmul.f32 %v623, 0.2
    %v646 = vmul.f32 %v628, 0.2
    %v647 = vmul.f32 %v633, 0.2
    %v648 = vmul.f32 %v638, 0.2
    %v649 = vsel %vm641, %v623, %v645
    %v650 = vsel %vm642, %v628, %v646
    %v651 = vsel %vm643, %v633, %v647
    %v652 = vsel %vm644, %v638, %v648
    %653 = vmatprep.subr.mxu0 0.0
    %654 = vmatpush1.msra.mxu0 %v95
    %655 = vmatprep.subr.mxu0 0.0
    %656 = vmatpush1.msra.mxu0 %v94
    %657 = vmatprep.subr.mxu0 0.0
    %658 = vmatpush1.msra.mxu0 %v93
    %659 = vmatprep.subr.mxu0 0.0
    %660 = vmatpush1.msra.mxu0 %v92
    %661 = vmatprep.subr.mxu0 0.0
    %662 = vmatpush1.msra.mxu0 %v91
    %663 = vmatprep.subr.mxu0 0.0
    %664 = vmatpush1.msra.mxu0 %v90
    %665 = vmatprep.subr.mxu0 0.0
    %666 = vmatpush1.msra.mxu0 %v89
    %667 = vmatprep.subr.mxu0 0.0
    %668 = vmatpush1.msra.mxu0 %v88
    %669 = vmatprep.subr.mxu0 0.0
    %670 = vmatpush1.msra.mxu0 %v87
    %671 = vmatprep.subr.mxu0 0.0
    %672 = vmatpush1.msra.mxu0 %v86
    %673 = vmatprep.subr.mxu0 0.0
    %674 = vmatpush1.msra.mxu0 %v85
    %675 = vmatprep.subr.mxu0 0.0
    %676 = vmatpush1.msra.mxu0 %v84
    %677 = vmatprep.subr.mxu0 0.0
    %678 = vmatpush1.msra.mxu0 %v83
    %679 = vmatprep.subr.mxu0 0.0
    %680 = vmatpush1.msra.mxu0 %v82
    %681 = vmatprep.subr.mxu0 0.0
    %682 = vmatpush1.msra.mxu0 %v81
    %683 = vmatprep.subr.mxu0 0.0
    %684 = vmatpush1.msra.mxu0 %v80
    %685 = vmatprep.subr.mxu0 0.0
    %686 = vmatpush2.msra.mxu0 0.0
    %687 = vmatprep.subr.mxu0 0.0
    %688 = vmatpush2.msra.mxu0 0.0
    %689 = vmatprep.subr.mxu0 0.0
    %690 = vmatpush2.msra.mxu0 0.0
    %691 = vmatprep.subr.mxu0 0.0
    %692 = vmatpush2.msra.mxu0 0.0
    %693 = vmatprep.subr.mxu0 0.0
    %694 = vmatpush2.msra.mxu0 0.0
    %695 = vmatprep.subr.mxu0 0.0
    %696 = vmatpush2.msra.mxu0 0.0
    %697 = vmatprep.subr.mxu0 0.0
    %698 = vmatpush2.msra.mxu0 0.0
    %699 = vmatprep.subr.mxu0 0.0
    %700 = vmatpush2.msra.mxu0 0.0
    %701 = vmatprep.subr.mxu0 0.0
    %702 = vmatpush2.msra.mxu0 0.0
    %703 = vmatprep.subr.mxu0 0.0
    %704 = vmatpush2.msra.mxu0 0.0
    %705 = vmatprep.subr.mxu0 0.0
    %706 = vmatpush2.msra.mxu0 0.0
    %707 = vmatprep.subr.mxu0 0.0
    %708 = vmatpush2.msra.mxu0 0.0
    %709 = vmatprep.subr.mxu0 0.0
    %710 = vmatpush2.msra.mxu0 0.0
    %711 = vmatprep.subr.mxu0 0.0
    %712 = vmatpush2.msra.mxu0 0.0
    %713 = vmatprep.subr.mxu0 0.0
    %714 = vmatpush2.msra.mxu0 0.0
    %715 = vmatprep.subr.mxu0 0.0
    %716 = vmatpush2.msra.mxu0 0.0
    %717 = vmatprep.mubr.f32.mxu0 0.0
    %718 = vmatmul.mubr.f32.gmra.mxu0 %v649
    %v719 = vpop.f32.mrf.mxu0
    %v720 = vadd.f32 0.0, %v719
    %v721 = vpop.f32.mrf.mxu0
    %722 = vmatprep.mubr.f32.mxu0 0.0
    %723 = vmatmul.mubr.f32.gmra.mxu0 %v650
    %v724 = vpop.f32.mrf.mxu0
    %v725 = vadd.f32 0.0, %v724
    %v726 = vpop.f32.mrf.mxu0
    %727 = vmatprep.mubr.f32.mxu0 0.0
    %728 = vmatmul.mubr.f32.gmra.mxu0 %v651
    %v729 = vpop.f32.mrf.mxu0
    %v730 = vadd.f32 0.0, %v729
    %v731 = vpop.f32.mrf.mxu0
    %732 = vmatprep.mubr.f32.mxu0 0.0
    %733 = vmatmul.mubr.f32.gmra.mxu0 %v652
    %v734 = vpop.f32.mrf.mxu0
    %v735 = vadd.f32 0.0, %v734
    %v736 = vpop.f32.mrf.mxu0
    %737 = vdwg.mxu0
    %v738 = vsub.f32 %v649, %v720
    %v739 = vsub.f32 %v650, %v725
    %v740 = vsub.f32 %v651, %v730
    %v741 = vsub.f32 %v652, %v735
    %v742 = vmul.f32 %v738, %v738
    %v743 = vmul.f32 %v739, %v739
    %v744 = vmul.f32 %v740, %v740
    %v745 = vmul.f32 %v741, %v741
    %746 = vmatprep.subr.mxu0 0.0
    %747 = vmatpush1.msra.mxu0 %v95
    %748 = vmatprep.subr.mxu0 0.0
    %749 = vmatpush1.msra.mxu0 %v94
    %750 = vmatprep.subr.mxu0 0.0
    %751 = vmatpush1.msra.mxu0 %v93
    %752 = vmatprep.subr.mxu0 0.0
    %753 = vmatpush1.msra.mxu0 %v92
    %754 = vmatprep.subr.mxu0 0.0
    %755 = vmatpush1.msra.mxu0 %v91
    %756 = vmatprep.subr.mxu0 0.0
    %757 = vmatpush1.msra.mxu0 %v90
    %758 = vmatprep.subr.mxu0 0.0
    %759 = vmatpush1.msra.mxu0 %v89
    %760 = vmatprep.subr.mxu0 0.0
    %761 = vmatpush1.msra.mxu0 %v88
    %762 = vmatprep.subr.mxu0 0.0
    %763 = vmatpush1.msra.mxu0 %v87
    %764 = vmatprep.subr.mxu0 0.0
    %765 = vmatpush1.msra.mxu0 %v86
    %766 = vmatprep.subr.mxu0 0.0
    %767 = vmatpush1.msra.mxu0 %v85
    %768 = vmatprep.subr.mxu0 0.0
    %769 = vmatpush1.msra.mxu0 %v84
    %770 = vmatprep.subr.mxu0 0.0
    %771 = vmatpush1.msra.mxu0 %v83
    %772 = vmatprep.subr.mxu0 0.0
    %773 = vmatpush1.msra.mxu0 %v82
    %774 = vmatprep.subr.mxu0 0.0
    %775 = vmatpush1.msra.mxu0 %v81
    %776 = vmatprep.subr.mxu0 0.0
    %777 = vmatpush1.msra.mxu0 %v80
    %778 = vmatprep.subr.mxu0 0.0
    %779 = vmatpush2.msra.mxu0 0.0
    %780 = vmatprep.subr.mxu0 0.0
    %781 = vmatpush2.msra.mxu0 0.0
    %782 = vmatprep.subr.mxu0 0.0
    %783 = vmatpush2.msra.mxu0 0.0
    %784 = vmatprep.subr.mxu0 0.0
    %785 = vmatpush2.msra.mxu0 0.0
    %786 = vmatprep.subr.mxu0 0.0
    %787 = vmatpush2.msra.mxu0 0.0
    %788 = vmatprep.subr.mxu0 0.0
    %789 = vmatpush2.msra.mxu0 0.0
    %790 = vmatprep.subr.mxu0 0.0
    %791 = vmatpush2.msra.mxu0 0.0
    %792 = vmatprep.subr.mxu0 0.0
    %793 = vmatpush2.msra.mxu0 0.0
    %794 = vmatprep.subr.mxu0 0.0
    %795 = vmatpush2.msra.mxu0 0.0
    %796 = vmatprep.subr.mxu0 0.0
    %797 = vmatpush2.msra.mxu0 0.0
    %798 = vmatprep.subr.mxu0 0.0
    %799 = vmatpush2.msra.mxu0 0.0
    %800 = vmatprep.subr.mxu0 0.0
    %801 = vmatpush2.msra.mxu0 0.0
    %802 = vmatprep.subr.mxu0 0.0
    %803 = vmatpush2.msra.mxu0 0.0
    %804 = vmatprep.subr.mxu0 0.0
    %805 = vmatpush2.msra.mxu0 0.0
    %806 = vmatprep.subr.mxu0 0.0
    %807 = vmatpush2.msra.mxu0 0.0
    %808 = vmatprep.subr.mxu0 0.0
    %809 = vmatpush2.msra.mxu0 0.0
    %810 = vmatprep.mubr.f32.mxu0 0.0
    %811 = vmatmul.mubr.f32.gmra.mxu0 %v742
    %v812 = vpop.f32.mrf.mxu0
    %v813 = vadd.f32 1e-05, %v812
    %v814 = vpop.f32.mrf.mxu0
    %815 = vmatprep.mubr.f32.mxu0 0.0
    %816 = vmatmul.mubr.f32.gmra.mxu0 %v743
    %v817 = vpop.f32.mrf.mxu0
    %v818 = vadd.f32 1e-05, %v817
    %v819 = vpop.f32.mrf.mxu0
    %820 = vmatprep.mubr.f32.mxu0 0.0
    %821 = vmatmul.mubr.f32.gmra.mxu0 %v744
    %v822 = vpop.f32.mrf.mxu0
    %v823 = vadd.f32 1e-05, %v822
    %v824 = vpop.f32.mrf.mxu0
    %825 = vmatprep.mubr.f32.mxu0 0.0
    %826 = vmatmul.mubr.f32.gmra.mxu0 %v745
    %v827 = vpop.f32.mrf.mxu0
    %v828 = vadd.f32 1e-05, %v827
    %v829 = vpop.f32.mrf.mxu0
    %830 = vdwg.mxu0
    %v831 = vrsqrt.pop %v813
    %v832 = vrsqrt.pop %v818
    %v833 = vrsqrt.pop %v823
    %v834 = vrsqrt.pop %v828
    %v835 = vmul.f32 %v738, %v831
    %v836 = vmul.f32 %v739, %v832
    %v837 = vmul.f32 %v740, %v833
    %v838 = vmul.f32 %v741, %v834
    %v839 = vmul.f32 %v835, %v517
    %v840 = vmul.f32 %v836, %v517
    %v841 = vmul.f32 %v837, %v517
    %v842 = vmul.f32 %v838, %v517
    %v843 = vadd.f32 %v839, %v527
    %v844 = vadd.f32 %v840, %v527
    %v845 = vadd.f32 %v841, %v527
    %v846 = vadd.f32 %v842, %v527
    %v847 = vld [vmem:[#allocation7] sm:$0xff]
    %v848 = vld [vmem:[#allocation7 + $0x8] sm:$0xff]
    %v849 = vld [vmem:[#allocation7 + $0x10] sm:$0xff]
    %v850 = vld [vmem:[#allocation7 + $0x18] sm:$0xff]
    %v851 = vld [vmem:[#allocation7 + $0x20] sm:$0xff]
    %v852 = vld [vmem:[#allocation7 + $0x28] sm:$0xff]
    %v853 = vld [vmem:[#allocation7 + $0x30] sm:$0xff]
    %v854 = vld [vmem:[#allocation7 + $0x38] sm:$0xff]
    %v855 = vld [vmem:[#allocation7 + $0x40] sm:$0xff]
    %v856 = vld [vmem:[#allocation7 + $0x48] sm:$0xff]
    %v857 = vld [vmem:[#allocation7 + $0x50] sm:$0xff]
    %v858 = vld [vmem:[#allocation7 + $0x58] sm:$0xff]
    %v859 = vld [vmem:[#allocation7 + $0x60] sm:$0xff]
    %v860 = vld [vmem:[#allocation7 + $0x68] sm:$0xff]
    %v861 = vld [vmem:[#allocation7 + $0x70] sm:$0xff]
    %v862 = vld [vmem:[#allocation7 + $0x78] sm:$0xff]
    %v863 = vld [vmem:[#allocation7 + $0x80] sm:$0xff]
    %v864 = vld [vmem:[#allocation7 + $0x88] sm:$0xff]
    %v865 = vld [vmem:[#allocation7 + $0x90] sm:$0xff]
    %v866 = vld [vmem:[#allocation7 + $0x98] sm:$0xff]
    %v867 = vld [vmem:[#allocation7 + $0xa0] sm:$0xff]
    %v868 = vld [vmem:[#allocation7 + $0xa8] sm:$0xff]
    %v869 = vld [vmem:[#allocation7 + $0xb0] sm:$0xff]
    %v870 = vld [vmem:[#allocation7 + $0xb8] sm:$0xff]
    %v871 = vld [vmem:[#allocation7 + $0xc0] sm:$0xff]
    %v872 = vld [vmem:[#allocation7 + $0xc8] sm:$0xff]
    %v873 = vld [vmem:[#allocation7 + $0xd0] sm:$0xff]
    %v874 = vld [vmem:[#allocation7 + $0xd8] sm:$0xff]
    %v875 = vld [vmem:[#allocation7 + $0xe0] sm:$0xff]
    %v876 = vld [vmem:[#allocation7 + $0xe8] sm:$0xff]
    %v877 = vld [vmem:[#allocation7 + $0xf0] sm:$0xff]
    %v878 = vld [vmem:[#allocation7 + $0xf8] sm:$0xff]
    %v879 = vld [vmem:[%s9] sm:$0x3]
    %v881 = vlaneseq
    %v882 = vshrl.u32 %v881, 7
    %v883 = vsub.s32 0, %v882
    %v884 = vrot.slane %v879, %v883
    %v885 = vlaneseq
    %v886 = vshrl.u32 %v885, 7
    %v887 = vsub.s32 1, %v886
    %v888 = vrot.slane %v879, %v887
    %891 = vmatprep.subr.mxu0 %v878
    %892 = vmatpush1.msra.mxu0 %v877
    %893 = vmatprep.subr.mxu0 %v876
    %894 = vmatpush1.msra.mxu0 %v875
    %895 = vmatprep.subr.mxu0 %v874
    %896 = vmatpush1.msra.mxu0 %v873
    %897 = vmatprep.subr.mxu0 %v872
    %898 = vmatpush1.msra.mxu0 %v871
    %899 = vmatprep.subr.mxu0 %v870
    %900 = vmatpush1.msra.mxu0 %v869
    %901 = vmatprep.subr.mxu0 %v868
    %902 = vmatpush1.msra.mxu0 %v867
    %903 = vmatprep.subr.mxu0 %v866
    %904 = vmatpush1.msra.mxu0 %v865
    %905 = vmatprep.subr.mxu0 %v864
    %906 = vmatpush1.msra.mxu0 %v863
    %907 = vmatprep.subr.mxu0 %v862
    %908 = vmatpush1.msra.mxu0 %v861
    %909 = vmatprep.subr.mxu0 %v860
    %910 = vmatpush1.msra.mxu0 %v859
    %911 = vmatprep.subr.mxu0 %v858
    %912 = vmatpush1.msra.mxu0 %v857
    %913 = vmatprep.subr.mxu0 %v856
    %914 = vmatpush1.msra.mxu0 %v855
    %915 = vmatprep.subr.mxu0 %v854
    %916 = vmatpush1.msra.mxu0 %v853
    %917 = vmatprep.subr.mxu0 %v852
    %918 = vmatpush1.msra.mxu0 %v851
    %919 = vmatprep.subr.mxu0 %v850
    %920 = vmatpush1.msra.mxu0 %v849
    %921 = vmatprep.subr.mxu0 %v848
    %922 = vmatpush1.msra.mxu0 %v847
    %923 = vmatprep.subr.mxu0 0.0
    %924 = vmatpush2.msra.mxu0 0.0
    %925 = vmatprep.subr.mxu0 0.0
    %926 = vmatpush2.msra.mxu0 0.0
    %927 = vmatprep.subr.mxu0 0.0
    %928 = vmatpush2.msra.mxu0 0.0
    %929 = vmatprep.subr.mxu0 0.0
    %930 = vmatpush2.msra.mxu0 0.0
    %931 = vmatprep.subr.mxu0 0.0
    %932 = vmatpush2.msra.mxu0 0.0
    %933 = vmatprep.subr.mxu0 0.0
    %934 = vmatpush2.msra.mxu0 0.0
    %935 = vmatprep.subr.mxu0 0.0
    %936 = vmatpush2.msra.mxu0 0.0
    %937 = vmatprep.subr.mxu0 0.0
    %938 = vmatpush2.msra.mxu0 0.0
    %939 = vmatprep.subr.mxu0 0.0
    %940 = vmatpush2.msra.mxu0 0.0
    %941 = vmatprep.subr.mxu0 0.0
    %942 = vmatpush2.msra.mxu0 0.0
    %943 = vmatprep.subr.mxu0 0.0
    %944 = vmatpush2.msra.mxu0 0.0
    %945 = vmatprep.subr.mxu0 0.0
    %946 = vmatpush2.msra.mxu0 0.0
    %947 = vmatprep.subr.mxu0 0.0
    %948 = vmatpush2.msra.mxu0 0.0
    %949 = vmatprep.subr.mxu0 0.0
    %950 = vmatpush2.msra.mxu0 0.0
    %951 = vmatprep.subr.mxu0 0.0
    %952 = vmatpush2.msra.mxu0 0.0
    %953 = vmatprep.subr.mxu0 0.0
    %954 = vmatpush2.msra.mxu0 0.0
    %955 = vmatprep.mubr.f32.mxu0 0.0
    %956 = vmatmul.mubr.f32.gmra.mxu0 %v843
    %v957 = vpop.f32.mrf.mxu0
    %v958 = vadd.f32 %v884, %v957
    %v959 = vpop.f32.mrf.mxu0
    %v960 = vadd.f32 %v888, %v959
    %961 = vmatprep.mubr.f32.mxu0 0.0
    %962 = vmatmul.mubr.f32.gmra.mxu0 %v844
    %v963 = vpop.f32.mrf.mxu0
    %v964 = vadd.f32 %v884, %v963
    %v965 = vpop.f32.mrf.mxu0
    %v966 = vadd.f32 %v888, %v965
    %967 = vmatprep.mubr.f32.mxu0 0.0
    %968 = vmatmul.mubr.f32.gmra.mxu0 %v845
    %v969 = vpop.f32.mrf.mxu0
    %v970 = vadd.f32 %v884, %v969
    %v971 = vpop.f32.mrf.mxu0
    %v972 = vadd.f32 %v888, %v971
    %973 = vmatprep.mubr.f32.mxu0 0.0
    %974 = vmatmul.mubr.f32.gmra.mxu0 %v846
    %v975 = vpop.f32.mrf.mxu0
    %v976 = vadd.f32 %v884, %v975
    %v977 = vpop.f32.mrf.mxu0
    %v978 = vadd.f32 %v888, %v977
    %979 = vdwg.mxu0
    %980 = vst [vmem:[#allocation8] sm:$0xff] %v958
    %981 = vst [vmem:[#allocation8 + $0x8] sm:$0xff] %v960
    %982 = vst [vmem:[#allocation8 + $0x10] sm:$0xff] %v964
    %983 = vst [vmem:[#allocation8 + $0x18] sm:$0xff] %v966
    %984 = vst [vmem:[#allocation8 + $0x20] sm:$0xff] %v970
    %985 = vst [vmem:[#allocation8 + $0x28] sm:$0xff] %v972
    %986 = vst [vmem:[#allocation8 + $0x30] sm:$0xff] %v976
    %987 = vst [vmem:[#allocation8 + $0x38] sm:$0xff] %v978
    // Predicated region
    $region54: #{tpu_custom_call.1} parent=1 // pred_check
      _
    $region55: #{tpu_custom_call.1} parent=1 // pred_check_branch
      %989 = sbr.rel (0) target = $region57
    $region56: #{tpu_custom_call.1} parent=1 // pred_region
      %s991 = ssub.s32 1024, 1024
      %992 = vsyncadd [#allocation4], %s991
      %s993 = sshll.u32 [#allocation8], 4
      %s994 = int_to_ptr.vmem [resolvable:$true] %s993
      %999 = dma.vmem_to_hbm [thread:$0]  %s994, 1024, %s10, [#allocation4], 256, 256, 16
    $region57: #{tpu_custom_call.1} parent=1 // pred_fallthru
      _
    // Predicated region
    $region58: #{tpu_custom_call.1} parent=1 // pred_check
      _
    $region59: #{tpu_custom_call.1} parent=1 // pred_check_branch
      %1001 = sbr.rel (0) target = $region61
    $region60: #{tpu_custom_call.1} parent=1 // pred_region
      %1002 = dma.done [#allocation4], 1024
    $region61: #{tpu_custom_call.1} parent=1 // pred_fallthru
      _
    %1003 = vsyncpa [#allocation3], 1
    %1004 = vsyncpa [#allocation6], 1
    %1005 = vsyncpa [#allocation4], 1

</llo_original>
